<compile_context>
chip_gen: v7x
topology: tpu7x:2x2x1
jax: 0.10.0
libtpu: 0.0.40
codegen_flags: <defaults>
</compile_context>

<pallas_src>
import jax
import jax.numpy as jnp
from jax.experimental import pallas as pl
from jax.experimental.pallas import tpu as pltpu


# --------------------------------------------------------------------------
# Small helpers
# --------------------------------------------------------------------------
def _round_up(v, m):
    return ((v + m - 1) // m) * m


def _slab_layout(C):
    """Row offsets / shape of the fused bf16 weight slab (16-row aligned)."""
    C2, C8 = C // 2, C // 8
    C8r = _round_up(C8, 8)
    Ca, C2a = C + 8, C2 + 8          # +8 rows: constant-1 row + zero padding
    r0 = 0
    r1 = _round_up(r0 + Ca, 16)      # fused stage-2 weights
    r2 = _round_up(r1 + C2a, 16)     # fused stage-3 weights
    r3 = _round_up(r2 + C8r, 16)     # fused genmask conv-1
    r4 = _round_up(r3 + C8r, 16)     # fused genmask conv-2
    rows = _round_up(r4 + 8, 16)
    cols = _round_up(Ca, 128)
    return (r0, r1, r2, r3, r4), rows, cols


# --------------------------------------------------------------------------
# Pallas kernel: fused fg/bg split + genmask + restruct on one pixel tile.
# Layout inside the kernel: (channels, pixels) -- pixels on lanes.
# --------------------------------------------------------------------------
def make_split_fb_kernel(C, offs, out_rows):
    C2, C8, C16 = C // 2, C // 8, C // 16
    C8r = _round_up(C8, 8)
    Ca, C2a = C + 8, C2 + 8
    r0, r1, r2, r3, r4 = offs

    def kernel(x_ref, w_ref, out_ref):
        x = x_ref[...]                                   # (Ca, tm) bf16, row C == 1

        # Weights are already folded (BN scale+shift) and bf16 on the host.
        # The bias column (C / C2) is contracted against the constant-1 row,
        # so there are no separate bias loads or adds in-kernel.
        w1 = w_ref[r0:r0 + Ca, 0:Ca]                     # fused [fg1; bg1] + bias col
        w2 = w_ref[r1:r1 + C2a, 0:Ca]                    # blockdiag(fg2, bg2) + bias col
        w3 = w_ref[r2:r2 + C8r, 0:C2a]                   # blockdiag(fg3, bg3) + bias col
        wg1 = w_ref[r3:r3 + C8r, 0:C8r]                  # blockdiag(g1, g1)
        wg2 = w_ref[r4:r4 + 8, 0:C8r]                    # rows 0:2 = blockdiag(g2, g2)

        def conv_relu(w, h):
            # 1x1 conv (channel matmul) + ReLU; bf16 MXU, f32 accumulation.
            return jnp.maximum(
                jnp.dot(w, h, preferred_element_type=jnp.float32), 0.0)

        h1 = conv_relu(w1, x)                            # (Ca,  tm) f32, row C  == 1
        h2 = conv_relu(w2, h1.astype(jnp.bfloat16))      # (C2a, tm) f32, row C2 == 1
        h3 = conv_relu(w3, h2.astype(jnp.bfloat16))      # (C8r, tm): rows 0:C16 = fg,
                                                         #            rows C16:2C16 = bg
        g1 = conv_relu(wg1, h3.astype(jnp.bfloat16))     # (C8r, tm)
        mask8 = jnp.dot(wg2, g1.astype(jnp.bfloat16),
                        preferred_element_type=jnp.float32)  # (8, tm); row0=fmask, row1=bmask

        # Restruct image.  Computed for every pixel tile: the merged 8-row
        # output block is written either way and the rec math is only a few
        # VPU ops on a (C/16, tm) slice, so per-tile gating buys nothing here.
        rec = h3[0:C16] * mask8[0:1] + h3[C16:2 * C16] * mask8[1:2]

        pieces = [mask8[0:2], rec]
        pad_rows = out_rows - 2 - C16
        if pad_rows:
            pieces.append(jnp.zeros((pad_rows, rec.shape[1]), jnp.float32))
        # Single lane-dense, 8-sublane-aligned store -> one output DMA per step.
        out_ref[...] = jnp.concatenate(pieces, axis=0)

    return kernel


# --------------------------------------------------------------------------
# Host-side wrapper: one launch over all (template + search) pixels.
# --------------------------------------------------------------------------
def split_fb_apply(slab, x_cm, C, num_tiles=2):
    """x_cm: (C, M) features -- channels on sublanes, pixels on lanes."""
    C16 = C // 16
    offs, rows, cols = _slab_layout(C)
    Ca = C + 8
    C2a = C // 2 + 8
    C8r = _round_up(C // 8, 8)
    out_rows = _round_up(2 + C16, 8)

    x_cm = x_cm.astype(jnp.bfloat16)
    M = x_cm.shape[1]
    # 2 big tiles instead of many 128-wide ones: fewer grid steps (overhead-
    # bound regime) while keeping the parallel axis even for v7x's 2 TCs.
    tm = max(128, _round_up(-(-M // num_tiles), 128))
    Mpad = num_tiles * tm

    # Augment with the constant-1 row (row C) that carries the folded BN
    # shifts, pad channel rows to a multiple of 8 and pixels to Mpad.  Padded
    # pixel columns have a zero "ones" row, so they produce exactly zero.
    aug = jnp.concatenate(
        [x_cm, jnp.ones((1, M), x_cm.dtype), jnp.zeros((7, M), x_cm.dtype)],
        axis=0)
    aug = jnp.pad(aug, ((0, 0), (0, Mpad - M)))

    macs_px = Ca * Ca + C2a * Ca + C8r * C2a + C8r * C8r + 8 * C8r
    cost = pl.CostEstimate(
        flops=2 * macs_px * Mpad,
        transcendentals=0,
        bytes_accessed=Ca * Mpad * 2 + rows * cols * 2 + out_rows * Mpad * 4)

    out = pl.pallas_call(
        make_split_fb_kernel(C, offs, out_rows),
        out_shape=jax.ShapeDtypeStruct((out_rows, Mpad), jnp.float32),
        grid_spec=pltpu.PrefetchScalarGridSpec(
            num_scalar_prefetch=0,
            grid=(num_tiles,),
            in_specs=[
                pl.BlockSpec((Ca, tm), lambda i: (0, i)),
                # Constant block index -> fetched once, not re-DMA'd per step.
                pl.BlockSpec((rows, cols), lambda i: (0, 0)),
            ],
            out_specs=pl.BlockSpec((out_rows, tm), lambda i: (0, i))),
        compiler_params=pltpu.CompilerParams(
            dimension_semantics=("parallel",)),
        cost_estimate=cost,
    )(aug, slab)
    return out[:, :M]


# --------------------------------------------------------------------------
# Parameter construction (deterministic synthetic), BN folding, slab packing.
# Conv weights stored PyTorch-style as (cout, cin).  BN folded with running
# stats (eval mode).
# --------------------------------------------------------------------------
def _fold_bn_into_weight(w, gamma, beta, mean, var, eps=1e-5):
    scale = gamma / jnp.sqrt(var + eps)
    return w * scale[:, None], beta - mean * scale


def _block_diag(a, b):
    ra, ca = a.shape
    rb, cb = b.shape
    top = jnp.concatenate([a, jnp.zeros((ra, cb), a.dtype)], axis=1)
    bot = jnp.concatenate([jnp.zeros((rb, ca), b.dtype), b], axis=1)
    return jnp.concatenate([top, bot], axis=0)


def init_params(key, out_channel):
    C = out_channel
    dims = [C, C // 2, C // 4, C // 16]
    params = {}
    n = 0

    def nxt():
        nonlocal n
        n += 1
        return jax.random.fold_in(key, n)

    for branch in ("f", "b"):
        for i in range(3):
            cin, cout = dims[i], dims[i + 1]
            params[f"w{branch}{i + 1}"] = (
                jax.random.normal(nxt(), (cout, cin), jnp.float32) * 0.1)
            params[f"g{branch}{i + 1}"] = (
                1.0 + 0.1 * jax.random.normal(nxt(), (cout,), jnp.float32))
            params[f"beta{branch}{i + 1}"] = (
                0.05 * jax.random.normal(nxt(), (cout,), jnp.float32))
            params[f"m{branch}{i + 1}"] = (
                0.05 * jax.random.normal(nxt(), (cout,), jnp.float32))
            params[f"v{branch}{i + 1}"] = (
                1.0 + 0.1 * jax.random.uniform(nxt(), (cout,), jnp.float32))

    c16 = dims[-1]
    params["wg1"] = jax.random.normal(nxt(), (c16, c16), jnp.float32) * 0.2
    params["wg2"] = jax.random.normal(nxt(), (1, c16), jnp.float32) * 0.2
    return params


def pack_params(params, C):
    """Fold BN, fuse fg/bg branches, pack everything into ONE bf16 slab.

    Called once at parameter-load time (hoisted out of the forward path)."""
    C2, C8 = C // 2, C // 8
    (r0, r1, r2, r3, r4), rows, cols = _slab_layout(C)

    def fold(branch, i):
        return _fold_bn_into_weight(
            params[f"w{branch}{i}"], params[f"g{branch}{i}"],
            params[f"beta{branch}{i}"], params[f"m{branch}{i}"],
            params[f"v{branch}{i}"])

    wf1, bf1 = fold("f", 1)
    wb1, bb1 = fold("b", 1)
    wf2, bf2 = fold("f", 2)
    wb2, bb2 = fold("b", 2)
    wf3, bf3 = fold("f", 3)
    wb3, bb3 = fold("b", 3)

    W1 = jnp.concatenate([wf1, wb1], axis=0)          # (C,  C)
    b1 = jnp.concatenate([bf1, bb1], axis=0)
    W2 = _block_diag(wf2, wb2)                        # (C/2, C)
    b2 = jnp.concatenate([bf2, bb2], axis=0)
    W3 = _block_diag(wf3, wb3)                        # (C/8, C/2)
    b3 = jnp.concatenate([bf3, bb3], axis=0)
    Wg1 = _block_diag(params["wg1"], params["wg1"])   # (C/8, C/8)
    Wg2 = _block_diag(params["wg2"], params["wg2"])   # (2,   C/8)

    slab = jnp.zeros((rows, cols), jnp.float32)
    # Stage 1: [W1 | b1] plus the constant-1 propagator at (row C, col C).
    slab = slab.at[r0:r0 + C, 0:C].set(W1)
    slab = slab.at[r0:r0 + C, C].set(b1)
    slab = slab.at[r0 + C, C].set(1.0)
    # Stage 2: [W2 | b2] plus propagator.
    slab = slab.at[r1:r1 + C2, 0:C].set(W2)
    slab = slab.at[r1:r1 + C2, C].set(b2)
    slab = slab.at[r1 + C2, C].set(1.0)
    # Stage 3: [W3 | b3] (no propagation needed past here; genmask has no bias).
    slab = slab.at[r2:r2 + C8, 0:C2].set(W3)
    slab = slab.at[r2:r2 + C8, C2].set(b3)
    # genmask.
    slab = slab.at[r3:r3 + C8, 0:C8].set(Wg1)
    slab = slab.at[r4:r4 + 2, 0:C8].set(Wg2)
    return slab.astype(jnp.bfloat16)


# --------------------------------------------------------------------------
# NCHW <-> (C, M) flattening helpers
# --------------------------------------------------------------------------
def _flatten_cm(x_nchw):
    B, C, H, W = x_nchw.shape
    return jnp.transpose(x_nchw, (1, 0, 2, 3)).reshape(C, B * H * W)


def _unflatten(a_cm, B, H, W):
    c = a_cm.shape[0]
    return jnp.transpose(a_cm.reshape(c, B, H, W), (1, 0, 2, 3))


# --------------------------------------------------------------------------
# Multi_Split_fb.forward (jitted end-to-end)
# --------------------------------------------------------------------------
def _forward(z_feat, x_feat, slab, noise_key):
    B, C, Hk, Wk = z_feat.shape
    _, _, Hs, Ws = x_feat.shape
    C16 = C // 16

    # bf16 cast BEFORE the transposes/concat so the layout ops move half bytes.
    k_cm = _flatten_cm(z_feat.astype(jnp.bfloat16))
    s_cm = _flatten_cm(x_feat.astype(jnp.bfloat16))
    Mk, Ms = k_cm.shape[1], s_cm.shape[1]
    x_all = jnp.concatenate([k_cm, s_cm], axis=1)            # (C, Mk+Ms)

    out = split_fb_apply(slab, x_all, C)                      # (8, M) f32
    mask_all = out[0:2]
    rec_all = out[2:2 + C16]

    k_mask = _unflatten(mask_all[:, :Mk], B, Hk, Wk)
    s_mask = _unflatten(mask_all[:, Mk:Mk + Ms], B, Hs, Ws)
    k_rec = _unflatten(rec_all[:, :Mk], B, Hk, Wk)            # search rec discarded

    # torch.randn(...).cuda() replaced with a deterministic JAX normal draw.
    kfixed_noise = jax.random.normal(noise_key, (B, C16, Hk, Wk), jnp.float32)
    # TODO(synk): sfixed_noise is allocated by the PyTorch module but never used
    # in any returned tensor, so it is omitted here.

    k_img = jnp.concatenate([k_rec, kfixed_noise], axis=1)
    return {"k_mask": k_mask, "s_mask": s_mask, "k_img": k_img}


_forward_jit = jax.jit(_forward)


def multi_split_fb_forward(z_fs, x_fs, slab, noise_key):
    """z_fs / x_fs: lists of features; only the last entry is used (as in the
    PyTorch module).  `slab` comes from pack_params (computed once)."""
    return _forward_jit(z_fs[-1], x_fs[-1], slab, noise_key)


# --------------------------------------------------------------------------
if __name__ == "__main__":
    key = jax.random.PRNGKey(0)
    k_param, k_z, k_x, k_noise = jax.random.split(key, 4)

    # Module config: out_channel = out_channels[-1] = 64 -> C/16 = 4.
    out_channel = 64
    B, Hk, Hs = 2, 8, 16

    params = init_params(k_param, out_channel)
    slab = pack_params(params, out_channel)   # one-time packing, outside forward

    z_last = jax.random.normal(k_z, (B, out_channel, Hk, Hk), jnp.float32)
    x_last = jax.random.normal(k_x, (B, out_channel, Hs, Hs), jnp.float32)

    results = multi_split_fb_forward([z_last], [x_last], slab, k_noise)
    jax.block_until_ready(results)

    assert results["k_mask"].shape == (B, 2, Hk, Hk)
    assert results["s_mask"].shape == (B, 2, Hs, Hs)
    assert results["k_img"].shape == (B, out_channel // 8, Hk, Hk)
    print("KERNEL_OK")
</pallas_src>

<mosaic_0001>
module attributes {stable_mosaic.version = 11 : i64} {
  func.func @kernel(%arg0: i32, %arg1: memref<72x384xbf16, #tpu.memory_space<vmem>>, %arg2: memref<176x128xbf16, #tpu.memory_space<vmem>>, %arg3: memref<8x384xf32, #tpu.memory_space<vmem>>) attributes {dimension_semantics = [#tpu.dimension_semantics<parallel>], iteration_bounds = array<i64: 2>, scalar_prefetch = 0 : i64, scratch_operands = 0 : i64, tpu.core_type = #tpu.core_type<tc>, window_params = [{transform_indices = @transform_0, window_bounds = array<i64: 72, 384>}, {pipeline_mode = #tpu.pipeline_mode<synchronous>, transform_indices = @transform_1, window_bounds = array<i64: 176, 128>}, {transform_indices = @transform_2, window_bounds = array<i64: 8, 384>}]} {
    %c0 = arith.constant 0 : index
    %c0_0 = arith.constant 0 : index
    %0 = vector.load %arg1[%c0, %c0_0] : memref<72x384xbf16, #tpu.memory_space<vmem>>, vector<72x384xbf16>
    %c0_1 = arith.constant 0 : index
    %c0_2 = arith.constant 0 : index
    %1 = vector.load %arg2[%c0_1, %c0_2] : memref<176x128xbf16, #tpu.memory_space<vmem>>, vector<72x72xbf16>
    %c80 = arith.constant 80 : index
    %c0_3 = arith.constant 0 : index
    %2 = vector.load %arg2[%c80, %c0_3] : memref<176x128xbf16, #tpu.memory_space<vmem>>, vector<40x72xbf16>
    %c128 = arith.constant 128 : index
    %c0_4 = arith.constant 0 : index
    %3 = vector.load %arg2[%c128, %c0_4] : memref<176x128xbf16, #tpu.memory_space<vmem>>, vector<8x40xbf16>
    %c144 = arith.constant 144 : index
    %c0_5 = arith.constant 0 : index
    %4 = vector.load %arg2[%c144, %c0_5] : memref<176x128xbf16, #tpu.memory_space<vmem>>, vector<8x8xbf16>
    %c160 = arith.constant 160 : index
    %c0_6 = arith.constant 0 : index
    %5 = vector.load %arg2[%c160, %c0_6] : memref<176x128xbf16, #tpu.memory_space<vmem>>, vector<8x8xbf16>
    %cst = arith.constant dense<0.000000e+00> : vector<72x384xf32>
    %6 = tpu.matmul %1, %0, %cst {dimension_numbers = #tpu.dot_dimension_numbers<[1], [0], [0], [1], [0, 0, 1, 1], [], []>} : vector<72x72xbf16>, vector<72x384xbf16>, vector<72x384xf32> -> vector<72x384xf32>
    %cst_7 = arith.constant 0.000000e+00 : f32
    %7 = vector.broadcast %cst_7 : f32 to vector<72x384xf32>
    %8 = arith.maximumf %6, %7 : vector<72x384xf32>
    %9 = arith.truncf %8 : vector<72x384xf32> to vector<72x384xbf16>
    %cst_8 = arith.constant dense<0.000000e+00> : vector<40x384xf32>
    %10 = tpu.matmul %2, %9, %cst_8 {dimension_numbers = #tpu.dot_dimension_numbers<[1], [0], [0], [1], [0, 0, 1, 1], [], []>} : vector<40x72xbf16>, vector<72x384xbf16>, vector<40x384xf32> -> vector<40x384xf32>
    %cst_9 = arith.constant 0.000000e+00 : f32
    %11 = vector.broadcast %cst_9 : f32 to vector<40x384xf32>
    %12 = arith.maximumf %10, %11 : vector<40x384xf32>
    %13 = arith.truncf %12 : vector<40x384xf32> to vector<40x384xbf16>
    %cst_10 = arith.constant dense<0.000000e+00> : vector<8x384xf32>
    %14 = tpu.matmul %3, %13, %cst_10 {dimension_numbers = #tpu.dot_dimension_numbers<[1], [0], [0], [1], [0, 0, 1, 1], [], []>} : vector<8x40xbf16>, vector<40x384xbf16>, vector<8x384xf32> -> vector<8x384xf32>
    %cst_11 = arith.constant 0.000000e+00 : f32
    %15 = vector.broadcast %cst_11 : f32 to vector<8x384xf32>
    %16 = arith.maximumf %14, %15 : vector<8x384xf32>
    %17 = arith.truncf %16 : vector<8x384xf32> to vector<8x384xbf16>
    %cst_12 = arith.constant dense<0.000000e+00> : vector<8x384xf32>
    %18 = tpu.matmul %4, %17, %cst_12 {dimension_numbers = #tpu.dot_dimension_numbers<[1], [0], [0], [1], [0, 0, 1, 1], [], []>} : vector<8x8xbf16>, vector<8x384xbf16>, vector<8x384xf32> -> vector<8x384xf32>
    %cst_13 = arith.constant 0.000000e+00 : f32
    %19 = vector.broadcast %cst_13 : f32 to vector<8x384xf32>
    %20 = arith.maximumf %18, %19 : vector<8x384xf32>
    %21 = arith.truncf %20 : vector<8x384xf32> to vector<8x384xbf16>
    %cst_14 = arith.constant dense<0.000000e+00> : vector<8x384xf32>
    %22 = tpu.matmul %5, %21, %cst_14 {dimension_numbers = #tpu.dot_dimension_numbers<[1], [0], [0], [1], [0, 0, 1, 1], [], []>} : vector<8x8xbf16>, vector<8x384xbf16>, vector<8x384xf32> -> vector<8x384xf32>
    %23 = vector.extract_strided_slice %16 {offsets = [0, 0], sizes = [4, 384], strides = [1, 1]} : vector<8x384xf32> to vector<4x384xf32>
    %24 = vector.extract_strided_slice %22 {offsets = [0, 0], sizes = [1, 384], strides = [1, 1]} : vector<8x384xf32> to vector<1x384xf32>
    %25 = vector.broadcast %24 : vector<1x384xf32> to vector<4x384xf32>
    %26 = arith.mulf %23, %25 : vector<4x384xf32>
    %27 = vector.extract_strided_slice %16 {offsets = [4, 0], sizes = [4, 384], strides = [1, 1]} : vector<8x384xf32> to vector<4x384xf32>
    %28 = vector.extract_strided_slice %22 {offsets = [1, 0], sizes = [1, 384], strides = [1, 1]} : vector<8x384xf32> to vector<1x384xf32>
    %29 = vector.broadcast %28 : vector<1x384xf32> to vector<4x384xf32>
    %30 = arith.mulf %27, %29 : vector<4x384xf32>
    %31 = arith.addf %26, %30 : vector<4x384xf32>
    %32 = vector.extract_strided_slice %22 {offsets = [0, 0], sizes = [2, 384], strides = [1, 1]} : vector<8x384xf32> to vector<2x384xf32>
    %cst_15 = arith.constant 0.000000e+00 : f32
    %33 = vector.broadcast %cst_15 : f32 to vector<2x384xf32>
    %34 = tpu.concatenate %32, %31, %33 in 0 : vector<2x384xf32>, vector<4x384xf32>, vector<2x384xf32> -> vector<8x384xf32>
    %c0_16 = arith.constant 0 : index
    %c0_17 = arith.constant 0 : index
    %35 = vector.load %arg3[%c0_16, %c0_17] : memref<8x384xf32, #tpu.memory_space<vmem>>, vector<8x384xf32>
    tpu.vector_store %arg3[%c0_16, %c0_17], %34 {strides = array<i32>} : memref<8x384xf32, #tpu.memory_space<vmem>>, vector<8x384xf32>,
    return
  }
  func.func @transform_0(%arg0: i32) -> (i32, i32) {
    %c0_i32 = arith.constant 0 : i32
    %c0_i32_0 = arith.constant 0 : i32
    return %c0_i32, %arg0 : i32, i32
  }
  func.func @transform_1(%arg0: i32) -> (i32, i32) {
    %c0_i32 = arith.constant 0 : i32
    %c0_i32_0 = arith.constant 0 : i32
    %c0_i32_1 = arith.constant 0 : i32
    return %c0_i32, %c0_i32_0 : i32, i32
  }
  func.func @transform_2(%arg0: i32) -> (i32, i32) {
    %c0_i32 = arith.constant 0 : i32
    %c0_i32_0 = arith.constant 0 : i32
    return %c0_i32, %arg0 : i32, i32
  }
}

</mosaic_0001>

<llo_original>
// kernel: _forward.1
$region0: #{_forward.1}
  #allocation0 [shape = 'u32[]', space=smem, size = 0x4, offset = 0x4, fixed_abs, tag = 'smem constant byte address 0x4 - core index']
  #allocation1 [shape = 'u32[144,128]{1,0:T(1,128)}', space=vmem, size = 0x12000, scoped, tag = 'internal scratch']
  %s0 = inlined_call_operand.vmem [shape: bf16[72,768], index: 0, kind: input, shape index: {}]
  %s1 = inlined_call_operand.vmem [shape: bf16[176,128], index: 1, kind: input, shape index: {}]
  %s2 = inlined_call_operand.vmem [shape: f32[8,768], index: 2, kind: output, shape index: {}]
  %s3 = sld [smem:[#allocation0]]
  $region67: #{_forward.1} parent=0
    _
  %s5 = ssub.s32 1, %s3
  %s6 = scalar_select 0, %s5, %s3
  $region1: #{_forward.1} parent=0
    #allocation2 [shape = 'u8[110592]{0}', space=vmem, size = 0x1b000, scoped, tag = 'input window, operand 0']
    loop: start=0, step=1, limit=4
    $region2: #{_forward.1} parent=1 // loop_pre_header
      _
    $region3: #{_forward.1} parent=1 // loop_header
      %s8 = sphi 0, %s12
      %p9 = scmp.ge.s32.totalorder %s8, 4
      %s18 = sphi 0, %s20
      %s21 = sphi 0, %s18
      %s22 = sphi 0, %s21
      %s38 = sphi 0, %s22
      %s42 = sphi 0, %s42
      %s44 = sphi 0, %s42
      %s45 = sphi 0, %s44
      %s59 = sphi 0, %s45
      %s65 = sphi 0, %s67
      %s68 = sphi 0, %s65
      %s69 = sphi 0, %s68
      %s85 = sphi 0, %s69
    $region4: #{_forward.1} parent=1 // loop_header_branch
      %11 = sbr.rel (%p9) target = $region8
    $region5: #{_forward.1} parent=1 // loop_body
      %s13 = ssub.s32 %s8, 1
      %s14 = ssub.s32 %s8, 2
      %s15 = sadd.s32 %s8, 1
      %s16 = ssub.s32 %s8, %s15
      %p17 = scmp.eq.s32.totalorder %s16, 0
      %s19 = sadd.s32 %s18, 1
      %s20 = scalar_select %p17, %s18, %s19
      %p23 = pneg %p17
      %p24 = scmp.eq.s32.totalorder %s8, 1
      %p25 = por %p23, %p24
      %p26 = scmp.ne.s32.totalorder %s18, %s21
      %p27 = scmp.eq.s32.totalorder %s8, 0
      %p28 = por %p26, %p27
      %p29 = scmp.ne.s32.totalorder %s18, %s21
      %p30 = scmp.eq.s32.totalorder %s13, 1
      %p31 = por %p29, %p30
      %p32 = scmp.ne.s32.totalorder %s21, %s22
      %p33 = scmp.eq.s32.totalorder %s13, 0
      %p34 = por %p32, %p33
      %p35 = scmp.ne.s32.totalorder %s21, %s22
      %p36 = scmp.eq.s32.totalorder %s14, 1
      %p37 = por %p35, %p36
      %p39 = scmp.ne.s32.totalorder %s22, %s38
      %p40 = scmp.eq.s32.totalorder %s14, 0
      %p41 = por %p39, %p40
      %s43 = sadd.s32 %s42, 1
      %p46 = scmp.eq.s32.totalorder %s8, 1
      %p47 = scmp.ne.s32.totalorder %s42, %s44
      %p48 = scmp.eq.s32.totalorder %s8, 0
      %p49 = por %p47, %p48
      %p50 = scmp.ne.s32.totalorder %s42, %s44
      %p51 = scmp.eq.s32.totalorder %s13, 1
      %p52 = por %p50, %p51
      %p53 = scmp.ne.s32.totalorder %s44, %s45
      %p54 = scmp.eq.s32.totalorder %s13, 0
      %p55 = por %p53, %p54
      %p56 = scmp.ne.s32.totalorder %s44, %s45
      %p57 = scmp.eq.s32.totalorder %s14, 1
      %p58 = por %p56, %p57
      %p60 = scmp.ne.s32.totalorder %s45, %s59
      %p61 = scmp.eq.s32.totalorder %s14, 0
      %p62 = por %p60, %p61
      %s63 = ssub.s32 %s8, %s15
      %p64 = scmp.eq.s32.totalorder %s63, 0
      %s66 = sadd.s32 %s65, 1
      %s67 = scalar_select %p64, %s65, %s66
      %p70 = pneg %p64
      %p71 = scmp.eq.s32.totalorder %s8, 1
      %p72 = por %p70, %p71
      %p73 = scmp.ne.s32.totalorder %s65, %s68
      %p74 = scmp.eq.s32.totalorder %s8, 0
      %p75 = por %p73, %p74
      %p76 = scmp.ne.s32.totalorder %s65, %s68
      %p77 = scmp.eq.s32.totalorder %s13, 1
      %p78 = por %p76, %p77
      %p79 = scmp.ne.s32.totalorder %s68, %s69
      %p80 = scmp.eq.s32.totalorder %s13, 0
      %p81 = por %p79, %p80
      %p82 = scmp.ne.s32.totalorder %s68, %s69
      %p83 = scmp.eq.s32.totalorder %s14, 1
      %p84 = por %p82, %p83
      %p86 = scmp.ne.s32.totalorder %s69, %s85
      %p87 = scmp.eq.s32.totalorder %s14, 0
      %p88 = por %p86, %p87
      %p89 = scmp.le.s32.totalorder 1, %s8
      %p90 = scmp.lt.s32.totalorder %s8, 3
      %p91 = pnand %p89, %p90
      %p92 = pneg %p91
      // Predicated region
      $region9: #{_forward.1} parent=5 // pred_check
        _
      $region10: #{_forward.1} parent=5 // pred_check_branch
        %94 = sbr.rel (%p91) target = $region12
      $region11: #{_forward.1} parent=5 // pred_region
        %s95 = ssub.s32 %s8, 1
        // Predicated region
        $region13: #{_forward.1} parent=11 // pred_check
          %p96 = pneg %p55
        $region14: #{_forward.1} parent=11 // pred_check_branch
          %98 = sbr.rel (%p96) target = $region16
        $region15: #{_forward.1} parent=11 // pred_region
          _
        $region16: #{_forward.1} parent=11 // pred_fallthru
          _
      $region12: #{_forward.1} parent=5 // pred_fallthru
        _
      %p99 = scmp.lt.s32.totalorder %s8, 2
      // Predicated region
      $region17: #{_forward.1} parent=5 // pred_check
        %p100 = pneg %p99
      $region18: #{_forward.1} parent=5 // pred_check_branch
        %102 = sbr.rel (%p100) target = $region20
      $region19: #{_forward.1} parent=5 // pred_region
        // Predicated region
        $region21: #{_forward.1} parent=19 // pred_check
          %p103 = pneg %p28
        $region22: #{_forward.1} parent=19 // pred_check_branch
          %105 = sbr.rel (%p103) target = $region24
        $region23: #{_forward.1} parent=19 // pred_region
          %s106 = sand.u32 %s18, 1
          %s107 = sand.u32 %s18, 1
          %s108 = smul.addr %s107, 108
          %s109 = scalar_lea.vmem [#allocation2], %s108
          %s110 = smul.u32 3, %s8
          %s111 = smul.addr %s110, 4
          %s112 = scalar_lea.vmem %s0, %s111
          // Predicated region
          $region25: #{_forward.1} parent=23 // pred_check
            _
          $region26: #{_forward.1} parent=23 // pred_check_branch
            %114 = sbr.rel (0) target = $region28
          $region27: #{_forward.1} parent=23 // pred_region
            // Predicated region
            $region29: #{_forward.1} parent=27 // pred_check
              _
            $region30: #{_forward.1} parent=27 // pred_check_branch
              %116 = sbr.rel (0) target = $region32
            $region31: #{_forward.1} parent=27 // pred_region
              %s117 = scalar_lea.vmem %s112, 8
              %s118 = scalar_lea.vmem %s109, 8 [#allocation2]
              loop: start=0, step=1, limit=1
              $region33: #{_forward.1} parent=31 // loop_pre_header
                _
              $region34: #{_forward.1} parent=31 // loop_header
                %s120 = sphi 0, %s124
                %p121 = scmp.ge.s32.totalorder %s120, 1
                %s125 = sphi %s112, %s112
                %s126 = sphi %s109, %s109
              $region35: #{_forward.1} parent=31 // loop_header_branch
                %123 = sbr.rel (%p121) target = $region39
              $region36: #{_forward.1} parent=31 // loop_body
                %v127 = vld [vmem:[%s125] sm:$0xff]
                %128 = vst [vmem:[%s126] sm:$0xff] %v127
                %v129 = vld [vmem:[%s125 + $0x18] sm:$0xff]
                %130 = vst [vmem:[%s126 + $0xc] sm:$0xff] %v129
                %v131 = vld [vmem:[%s125 + $0x30] sm:$0xff]
                %132 = vst [vmem:[%s126 + $0x18] sm:$0xff] %v131
                %v133 = vld [vmem:[%s125 + $0x48] sm:$0xff]
                %134 = vst [vmem:[%s126 + $0x24] sm:$0xff] %v133
                %v135 = vld [vmem:[%s125 + $0x60] sm:$0xff]
                %136 = vst [vmem:[%s126 + $0x30] sm:$0xff] %v135
                %v137 = vld [vmem:[%s125 + $0x78] sm:$0xff]
                %138 = vst [vmem:[%s126 + $0x3c] sm:$0xff] %v137
                %v139 = vld [vmem:[%s125 + $0x90] sm:$0xff]
                %140 = vst [vmem:[%s126 + $0x48] sm:$0xff] %v139
                %v141 = vld [vmem:[%s125 + $0xa8] sm:$0xff]
                %142 = vst [vmem:[%s126 + $0x54] sm:$0xff] %v141
                %v143 = vld [vmem:[%s125 + $0xc0] sm:$0xff]
                %144 = vst [vmem:[%s126 + $0x60] sm:$0xff] %v143
              $region37: #{_forward.1} parent=31 // loop_footer
                %s124 = sadd.s32 1, %s120
              $region38: #{_forward.1} parent=31 // loop_footer_branch
                %119 = sbr.rel target = $region34
              $region39: #{_forward.1} parent=31 // loop_exit
                _
              loop: start=0, step=1, limit=1
              $region40: #{_forward.1} parent=31 // loop_pre_header
                _
              $region41: #{_forward.1} parent=31 // loop_header
                %s147 = sphi 0, %s151
                %p148 = scmp.ge.s32.totalorder %s147, 1
                %s152 = sphi %s117, %s117
                %s153 = sphi %s118, %s118
              $region42: #{_forward.1} parent=31 // loop_header_branch
                %150 = sbr.rel (%p148) target = $region46
              $region43: #{_forward.1} parent=31 // loop_body
                %v154 = vld [vmem:[%s152] sm:$0xf]
                %155 = vst [vmem:[%s153] sm:$0xf] %v154
                %v156 = vld [vmem:[%s152 + $0x18] sm:$0xf]
                %157 = vst [vmem:[%s153 + $0xc] sm:$0xf] %v156
                %v158 = vld [vmem:[%s152 + $0x30] sm:$0xf]
                %159 = vst [vmem:[%s153 + $0x18] sm:$0xf] %v158
                %v160 = vld [vmem:[%s152 + $0x48] sm:$0xf]
                %161 = vst [vmem:[%s153 + $0x24] sm:$0xf] %v160
                %v162 = vld [vmem:[%s152 + $0x60] sm:$0xf]
                %163 = vst [vmem:[%s153 + $0x30] sm:$0xf] %v162
                %v164 = vld [vmem:[%s152 + $0x78] sm:$0xf]
                %165 = vst [vmem:[%s153 + $0x3c] sm:$0xf] %v164
                %v166 = vld [vmem:[%s152 + $0x90] sm:$0xf]
                %167 = vst [vmem:[%s153 + $0x48] sm:$0xf] %v166
                %v168 = vld [vmem:[%s152 + $0xa8] sm:$0xf]
                %169 = vst [vmem:[%s153 + $0x54] sm:$0xf] %v168
                %v170 = vld [vmem:[%s152 + $0xc0] sm:$0xf]
                %171 = vst [vmem:[%s153 + $0x60] sm:$0xf] %v170
              $region44: #{_forward.1} parent=31 // loop_footer
                %s151 = sadd.s32 1, %s147
              $region45: #{_forward.1} parent=31 // loop_footer_branch
                %146 = sbr.rel target = $region41
              $region46: #{_forward.1} parent=31 // loop_exit
                _
            $region32: #{_forward.1} parent=27 // pred_fallthru
              _
          $region28: #{_forward.1} parent=23 // pred_fallthru
            _
          %172 = vnop
        $region24: #{_forward.1} parent=19 // pred_fallthru
          _
      $region20: #{_forward.1} parent=5 // pred_fallthru
        _
      %p173 = scmp.le.s32.totalorder 1, %s8
      %p174 = scmp.lt.s32.totalorder %s8, 3
      %p175 = pnand %p173, %p174
      %p176 = pneg %p175
      // Predicated region
      $region47: #{_forward.1} parent=5 // pred_check
        _
      $region48: #{_forward.1} parent=5 // pred_check_branch
        %178 = sbr.rel (%p175) target = $region50
      $region49: #{_forward.1} parent=5 // pred_region
        %s179 = ssub.s32 %s8, 1
        %s180 = sand.u32 %s21, 1
        %s181 = sand.u32 %s21, 1
        %s182 = smul.addr %s181, 108
        %s183 = scalar_lea.vmem [#allocation2], %s182
        // Predicated region
        $region51: #{_forward.1} parent=49 // pred_check
          %p184 = pneg %p34
        $region52: #{_forward.1} parent=49 // pred_check_branch
          %186 = sbr.rel (%p184) target = $region54
        $region53: #{_forward.1} parent=49 // pred_region
          _
        $region54: #{_forward.1} parent=49 // pred_fallthru
          _
        %s187 = sand.u32 %s21, 1
        %s188 = sand.u32 %s21, 1
        %s189 = smul.addr %s188, 108
        %s190 = scalar_lea.vmem [#allocation2], %s189
        %p191 = pneg %p34
        %p192 = pneg %p31
        %p193 = pneg %p55
        %p194 = pneg %p52
        %p195 = pneg %p81
        %p196 = pneg %p78
        %s197 = smul.u32 3, %s13
        %p198 = scmp.lt.s32.totalorder %s197, 5
        %s199 = scalar_select %p198, %s197, 5
        %s200 = smul.addr %s199, 8
        %s201 = scalar_lea.vmem %s2, %s200
        %s202 = smul.u32 3, %s13
        %s203 = smul.u32 3, %s13
        %p204 = scmp.lt.s32.totalorder %s203, 5
        %s205 = scalar_select %p204, %s203, 5
        %s206 = smul.addr %s205, 8
        %s207 = scalar_lea.vmem %s2, %s206
        %s208 = smul.u32 3, %s13
        %v210 = vld [vmem:[%s183] sm:$0xff]
        %v211 = vld [vmem:[%s183 + $0x8] sm:$0xf]
        %v212 = vld [vmem:[%s183 + $0xc] sm:$0xff]
        %v213 = vld [vmem:[%s183 + $0x14] sm:$0xf]
        %v214 = vld [vmem:[%s183 + $0x18] sm:$0xff]
        %v215 = vld [vmem:[%s183 + $0x20] sm:$0xf]
        %v216 = vld [vmem:[%s183 + $0x24] sm:$0xff]
        %v217 = vld [vmem:[%s183 + $0x2c] sm:$0xf]
        %v218 = vld [vmem:[%s183 + $0x30] sm:$0xff]
        %v219 = vld [vmem:[%s183 + $0x38] sm:$0xf]
        %v220 = vld [vmem:[%s183 + $0x3c] sm:$0xff]
        %v221 = vld [vmem:[%s183 + $0x44] sm:$0xf]
        %v222 = vld [vmem:[%s183 + $0x48] sm:$0xff]
        %v223 = vld [vmem:[%s183 + $0x50] sm:$0xf]
        %v224 = vld [vmem:[%s183 + $0x54] sm:$0xff]
        %v225 = vld [vmem:[%s183 + $0x5c] sm:$0xf]
        %v226 = vld [vmem:[%s183 + $0x60] sm:$0xff]
        %v227 = vld [vmem:[%s183 + $0x68] sm:$0xf]
        %v228 = vld [vmem:[%s1] sm:$0xf]
        %v229 = vld [vmem:[%s1 + $0x4] sm:$0xf]
        %v230 = vld [vmem:[%s1 + $0x8] sm:$0xf]
        %v231 = vld [vmem:[%s1 + $0xc] sm:$0xf]
        %v232 = vld [vmem:[%s1 + $0x10] sm:$0xf]
        %v233 = vld [vmem:[%s1 + $0x14] sm:$0xf]
        %v234 = vld [vmem:[%s1 + $0x18] sm:$0xf]
        %v235 = vld [vmem:[%s1 + $0x1c] sm:$0xf]
        %v236 = vld [vmem:[%s1 + $0x20] sm:$0xf]
        %v237 = vld [vmem:[%s1 + $0x28] sm:$0xf]
        %v238 = vld [vmem:[%s1 + $0x2c] sm:$0xf]
        %v239 = vld [vmem:[%s1 + $0x30] sm:$0xf]
        %v240 = vld [vmem:[%s1 + $0x34] sm:$0xf]
        %v241 = vld [vmem:[%s1 + $0x38] sm:$0xf]
        %v242 = vld [vmem:[%s1 + $0x40] sm:$0xf]
        %v243 = vld [vmem:[%s1 + $0x48] sm:$0xf]
        %v244 = vld [vmem:[%s1 + $0x50] sm:$0xf]
        %v254 = vunpack.c.l.b16 %v228
        %v255 = vunpack.c.l.b16 %v229
        %v256 = vunpack.c.l.b16 %v230
        %v257 = vunpack.c.l.b16 %v231
        %v258 = vunpack.c.l.b16 %v232
        %v259 = vunpack.c.l.b16 %v233
        %v260 = vunpack.c.l.b16 %v234
        %v261 = vunpack.c.l.b16 %v235
        %v262 = vunpack.c.l.b16 %v236
        %v263 = vpack.c.b16 %v255, %v254
        %v264 = vpack.c.b16 %v257, %v256
        %v265 = vpack.c.b16 %v259, %v258
        %v266 = vpack.c.b16 %v261, %v260
        %v267 = vpack.c.b16 %v262, %v262
        %v286 = vunpack.c.l.b16 %v210
        %v287 = vunpack.c.h.b16 %v210
        %v288 = vunpack.c.l.b16 %v211
        %v289 = vunpack.c.l.b16 %v212
        %v290 = vunpack.c.h.b16 %v212
        %v291 = vunpack.c.l.b16 %v213
        %v292 = vunpack.c.l.b16 %v214
        %v293 = vunpack.c.h.b16 %v214
        %v294 = vunpack.c.l.b16 %v215
        %v295 = vunpack.c.l.b16 %v216
        %v296 = vunpack.c.h.b16 %v216
        %v297 = vunpack.c.l.b16 %v217
        %v298 = vunpack.c.l.b16 %v218
        %v299 = vunpack.c.h.b16 %v218
        %v300 = vunpack.c.l.b16 %v219
        %v301 = vunpack.c.l.b16 %v220
        %v302 = vunpack.c.h.b16 %v220
        %v303 = vunpack.c.l.b16 %v221
        %v304 = vunpack.c.l.b16 %v222
        %v305 = vunpack.c.h.b16 %v222
        %v306 = vunpack.c.l.b16 %v223
        %v307 = vunpack.c.l.b16 %v224
        %v308 = vunpack.c.h.b16 %v224
        %v309 = vunpack.c.l.b16 %v225
        %v310 = vunpack.c.l.b16 %v226
        %v311 = vunpack.c.h.b16 %v226
        %v312 = vunpack.c.l.b16 %v227
        %v313 = vpack.c.b16 %v289, %v286
        %v314 = vpack.c.b16 %v290, %v287
        %v315 = vpack.c.b16 %v291, %v288
        %v316 = vpack.c.b16 %v295, %v292
        %v317 = vpack.c.b16 %v296, %v293
        %v318 = vpack.c.b16 %v297, %v294
        %v319 = vpack.c.b16 %v301, %v298
        %v320 = vpack.c.b16 %v302, %v299
        %v321 = vpack.c.b16 %v303, %v300
        %v322 = vpack.c.b16 %v307, %v304
        %v323 = vpack.c.b16 %v308, %v305
        %v324 = vpack.c.b16 %v309, %v306
        %v325 = vpack.c.b16 %v310, %v310
        %v326 = vpack.c.b16 %v311, %v311
        %v327 = vpack.c.b16 %v312, %v312
        %vm340 = vcmask 588800
        %v342 = vsel %vm340, %v263, 0
        %v345 = vsel %vm340, %v264, 0
        %v348 = vsel %vm340, %v265, 0
        %v351 = vsel %vm340, %v266, 0
        %v354 = vsel %vm340, %v267, 0
        %vm356 = vcmask 1043456
        %v358 = vsel %vm356, %v325, 0
        %v361 = vsel %vm356, %v326, 0
        %v364 = vsel %vm356, %v327, 0
        %366 = vmatprep.subr.bf16.mxu0 %v314
        %367 = vmatpush1.bf16.msra.mxu0 %v313
        %368 = vmatprep.subr.bf16.mxu0 %v317
        %369 = vmatpush1.bf16.msra.mxu0 %v316
        %370 = vmatprep.subr.bf16.mxu0 %v320
        %371 = vmatpush1.bf16.msra.mxu0 %v319
        %372 = vmatprep.subr.bf16.mxu0 %v323
        %373 = vmatpush1.bf16.msra.mxu0 %v322
        %374 = vmatprep.subr.bf16.mxu0 %v361
        %375 = vmatpush1.bf16.msra.mxu0 %v358
        %376 = vmatprep.subr.bf16.mxu0 0
        %377 = vmatpush1.bf16.msra.mxu0 0
        %378 = vmatprep.subr.bf16.mxu0 0
        %379 = vmatpush1.bf16.msra.mxu0 0
        %380 = vmatprep.subr.bf16.mxu0 0
        %381 = vmatpush1.bf16.msra.mxu0 0
        %382 = vmatprep.subr.bf16.mxu0 0
        %383 = vmatpush1.bf16.msra.mxu0 0
        %384 = vmatprep.subr.bf16.mxu0 0
        %385 = vmatpush1.bf16.msra.mxu0 0
        %386 = vmatprep.subr.bf16.mxu0 0
        %387 = vmatpush1.bf16.msra.mxu0 0
        %388 = vmatprep.subr.bf16.mxu0 0
        %389 = vmatpush1.bf16.msra.mxu0 0
        %390 = vmatprep.subr.bf16.mxu0 0
        %391 = vmatpush1.bf16.msra.mxu0 0
        %392 = vmatprep.subr.bf16.mxu0 0
        %393 = vmatpush1.bf16.msra.mxu0 0
        %394 = vmatprep.subr.bf16.mxu0 0
        %395 = vmatpush1.bf16.msra.mxu0 0
        %396 = vmatprep.subr.bf16.mxu0 0
        %397 = vmatpush1.bf16.msra.mxu0 0
        %398 = vmatprep.mubr.bf16.mxu0 0
        %399 = vmatmul.mubr.bf16.gmra.mrb[0].mxu0 %v342
        %v400 = vpop.f32.mrb[0].mxu0
        %v401 = vadd.f32 0.0, %v400
        %v402 = vpop.f32.mrb[0].mxu0
        %v403 = vadd.f32 0.0, %v402
        %v404 = vpop.f32.mrb[0].mxu0
        %v405 = vadd.f32 0.0, %v404
        %v406 = vpop.f32.mrb[0].mxu0
        %v407 = vadd.f32 0.0, %v406
        %408 = vmatprep.mubr.bf16.mxu0 0
        %409 = vmatmul.mubr.bf16.gmra.mrb[0].mxu0 %v345
        %v410 = vpop.f32.mrb[0].mxu0
        %v411 = vadd.f32 0.0, %v410
        %v412 = vpop.f32.mrb[0].mxu0
        %v413 = vadd.f32 0.0, %v412
        %v414 = vpop.f32.mrb[0].mxu0
        %v415 = vadd.f32 0.0, %v414
        %v416 = vpop.f32.mrb[0].mxu0
        %v417 = vadd.f32 0.0, %v416
        %418 = vmatprep.mubr.bf16.mxu0 0
        %419 = vmatmul.mubr.bf16.gmra.mrb[0].mxu0 %v348
        %v420 = vpop.f32.mrb[0].mxu0
        %v421 = vadd.f32 0.0, %v420
        %v422 = vpop.f32.mrb[0].mxu0
        %v423 = vadd.f32 0.0, %v422
        %v424 = vpop.f32.mrb[0].mxu0
        %v425 = vadd.f32 0.0, %v424
        %v426 = vpop.f32.mrb[0].mxu0
        %v427 = vadd.f32 0.0, %v426
        %428 = vmatprep.mubr.bf16.mxu0 0
        %429 = vmatmul.mubr.bf16.gmra.mrb[0].mxu0 %v351
        %v430 = vpop.f32.mrb[0].mxu0
        %v431 = vadd.f32 0.0, %v430
        %v432 = vpop.f32.mrb[0].mxu0
        %v433 = vadd.f32 0.0, %v432
        %v434 = vpop.f32.mrb[0].mxu0
        %v435 = vadd.f32 0.0, %v434
        %v436 = vpop.f32.mrb[0].mxu0
        %v437 = vadd.f32 0.0, %v436
        %438 = vmatprep.mubr.bf16.mxu0 0
        %439 = vmatmul.mubr.bf16.gmra.mrb[0].mxu0 %v354
        %v440 = vpop.f32.mrb[0].mxu0
        %v441 = vadd.f32 0.0, %v440
        %v442 = vpop.f32.mrb[0].mxu0
        %v443 = vadd.f32 0.0, %v442
        %v444 = vpop.f32.mrb[0].mxu0
        %v445 = vpop.f32.mrb[0].mxu0
        %446 = vdwg.mxu0
        %447 = vmatprep.subr.bf16.mxu0 0
        %448 = vmatpush1.bf16.msra.mxu0 %v315
        %449 = vmatprep.subr.bf16.mxu0 0
        %450 = vmatpush1.bf16.msra.mxu0 %v318
        %451 = vmatprep.subr.bf16.mxu0 0
        %452 = vmatpush1.bf16.msra.mxu0 %v321
        %453 = vmatprep.subr.bf16.mxu0 0
        %454 = vmatpush1.bf16.msra.mxu0 %v324
        %455 = vmatprep.subr.bf16.mxu0 0
        %456 = vmatpush1.bf16.msra.mxu0 %v364
        %457 = vmatprep.subr.bf16.mxu0 0
        %458 = vmatpush1.bf16.msra.mxu0 0
        %459 = vmatprep.subr.bf16.mxu0 0
        %460 = vmatpush1.bf16.msra.mxu0 0
        %461 = vmatprep.subr.bf16.mxu0 0
        %462 = vmatpush1.bf16.msra.mxu0 0
        %463 = vmatprep.subr.bf16.mxu0 0
        %464 = vmatpush1.bf16.msra.mxu0 0
        %465 = vmatprep.subr.bf16.mxu0 0
        %466 = vmatpush1.bf16.msra.mxu0 0
        %467 = vmatprep.subr.bf16.mxu0 0
        %468 = vmatpush1.bf16.msra.mxu0 0
        %469 = vmatprep.subr.bf16.mxu0 0
        %470 = vmatpush1.bf16.msra.mxu0 0
        %471 = vmatprep.subr.bf16.mxu0 0
        %472 = vmatpush1.bf16.msra.mxu0 0
        %473 = vmatprep.subr.bf16.mxu0 0
        %474 = vmatpush1.bf16.msra.mxu0 0
        %475 = vmatprep.subr.bf16.mxu0 0
        %476 = vmatpush1.bf16.msra.mxu0 0
        %477 = vmatprep.subr.bf16.mxu0 0
        %478 = vmatpush1.bf16.msra.mxu0 0
        %479 = vmatprep.mubr.bf16.mxu0 0
        %480 = vmatmul.mubr.bf16.gmra.mrb[0].mxu0 %v342
        %v481 = vpop.f32.mrb[0].mxu0
        %v482 = vadd.f32 0.0, %v481
        %v483 = vpop.f32.mrb[0].mxu0
        %v484 = vpop.f32.mrb[0].mxu0
        %v485 = vadd.f32 0.0, %v484
        %v486 = vpop.f32.mrb[0].mxu0
        %487 = vmatprep.mubr.bf16.mxu0 0
        %488 = vmatmul.mubr.bf16.gmra.mrb[0].mxu0 %v345
        %v489 = vpop.f32.mrb[0].mxu0
        %v490 = vadd.f32 0.0, %v489
        %v491 = vpop.f32.mrb[0].mxu0
        %v492 = vpop.f32.mrb[0].mxu0
        %v493 = vadd.f32 0.0, %v492
        %v494 = vpop.f32.mrb[0].mxu0
        %495 = vmatprep.mubr.bf16.mxu0 0
        %496 = vmatmul.mubr.bf16.gmra.mrb[0].mxu0 %v348
        %v497 = vpop.f32.mrb[0].mxu0
        %v498 = vadd.f32 0.0, %v497
        %v499 = vpop.f32.mrb[0].mxu0
        %v500 = vpop.f32.mrb[0].mxu0
        %v501 = vadd.f32 0.0, %v500
        %v502 = vpop.f32.mrb[0].mxu0
        %503 = vmatprep.mubr.bf16.mxu0 0
        %504 = vmatmul.mubr.bf16.gmra.mrb[0].mxu0 %v351
        %v505 = vpop.f32.mrb[0].mxu0
        %v506 = vadd.f32 0.0, %v505
        %v507 = vpop.f32.mrb[0].mxu0
        %v508 = vpop.f32.mrb[0].mxu0
        %v509 = vadd.f32 0.0, %v508
        %v510 = vpop.f32.mrb[0].mxu0
        %511 = vmatprep.mubr.bf16.mxu0 0
        %512 = vmatmul.mubr.bf16.gmra.mrb[0].mxu0 %v354
        %v513 = vpop.f32.mrb[0].mxu0
        %v514 = vadd.f32 0.0, %v513
        %v515 = vpop.f32.mrb[0].mxu0
        %v516 = vpop.f32.mrb[0].mxu0
        %v517 = vpop.f32.mrb[0].mxu0
        %518 = vdwg.mxu0
        %v519 = vmax.f32 %v401, 0.0
        %v520 = vmax.f32 %v403, 0.0
        %v521 = vmax.f32 %v482, 0.0
        %v522 = vmax.f32 %v405, 0.0
        %v523 = vmax.f32 %v407, 0.0
        %v524 = vmax.f32 %v485, 0.0
        %v525 = vmax.f32 %v411, 0.0
        %v526 = vmax.f32 %v413, 0.0
        %v527 = vmax.f32 %v490, 0.0
        %v528 = vmax.f32 %v415, 0.0
        %v529 = vmax.f32 %v417, 0.0
        %v530 = vmax.f32 %v493, 0.0
        %v531 = vmax.f32 %v421, 0.0
        %v532 = vmax.f32 %v423, 0.0
        %v533 = vmax.f32 %v498, 0.0
        %v534 = vmax.f32 %v425, 0.0
        %v535 = vmax.f32 %v427, 0.0
        %v536 = vmax.f32 %v501, 0.0
        %v537 = vmax.f32 %v431, 0.0
        %v538 = vmax.f32 %v433, 0.0
        %v539 = vmax.f32 %v506, 0.0
        %v540 = vmax.f32 %v435, 0.0
        %v541 = vmax.f32 %v437, 0.0
        %v542 = vmax.f32 %v509, 0.0
        %v543 = vmax.f32 %v441, 0.0
        %v544 = vmax.f32 %v443, 0.0
        %v545 = vmax.f32 %v514, 0.0
        %v546 = vpack.c.bf16 %v522, %v519
        %v547 = vpack.c.bf16 %v523, %v520
        %v548 = vpack.c.bf16 %v524, %v521
        %v549 = vpack.c.bf16 %v528, %v525
        %v550 = vpack.c.bf16 %v529, %v526
        %v551 = vpack.c.bf16 %v530, %v527
        %v552 = vpack.c.bf16 %v534, %v531
        %v553 = vpack.c.bf16 %v535, %v532
        %v554 = vpack.c.bf16 %v536, %v533
        %v555 = vpack.c.bf16 %v540, %v537
        %v556 = vpack.c.bf16 %v541, %v538
        %v557 = vpack.c.bf16 %v542, %v539
        %v558 = vpack.c.bf16 %v543, %v543
        %v559 = vpack.c.bf16 %v544, %v544
        %v560 = vpack.c.bf16 %v545, %v545
        %v566 = vunpack.c.l.b16 %v237
        %v567 = vunpack.c.l.b16 %v238
        %v568 = vunpack.c.l.b16 %v239
        %v569 = vunpack.c.l.b16 %v240
        %v570 = vunpack.c.l.b16 %v241
        %v571 = vpack.c.b16 %v567, %v566
        %v572 = vpack.c.b16 %v569, %v568
        %v573 = vpack.c.b16 %v570, %v570
        %v575 = vsel %vm340, %v571, 0
        %v578 = vsel %vm340, %v572, 0
        %v581 = vsel %vm340, %v573, 0
        %v584 = vsel %vm356, %v558, 0
        %v587 = vsel %vm356, %v559, 0
        %v590 = vsel %vm356, %v560, 0
        %592 = vmatprep.subr.bf16.mxu0 %v547
        %593 = vmatpush1.bf16.msra.mxu0 %v546
        %594 = vmatprep.subr.bf16.mxu0 %v550
        %595 = vmatpush1.bf16.msra.mxu0 %v549
        %596 = vmatprep.subr.bf16.mxu0 %v553
        %597 = vmatpush1.bf16.msra.mxu0 %v552
        %598 = vmatprep.subr.bf16.mxu0 %v556
        %599 = vmatpush1.bf16.msra.mxu0 %v555
        %600 = vmatprep.subr.bf16.mxu0 %v587
        %601 = vmatpush1.bf16.msra.mxu0 %v584
        %602 = vmatprep.subr.bf16.mxu0 0
        %603 = vmatpush1.bf16.msra.mxu0 0
        %604 = vmatprep.subr.bf16.mxu0 0
        %605 = vmatpush1.bf16.msra.mxu0 0
        %606 = vmatprep.subr.bf16.mxu0 0
        %607 = vmatpush1.bf16.msra.mxu0 0
        %608 = vmatprep.subr.bf16.mxu0 0
        %609 = vmatpush1.bf16.msra.mxu0 0
        %610 = vmatprep.subr.bf16.mxu0 0
        %611 = vmatpush1.bf16.msra.mxu0 0
        %612 = vmatprep.subr.bf16.mxu0 0
        %613 = vmatpush1.bf16.msra.mxu0 0
        %614 = vmatprep.subr.bf16.mxu0 0
        %615 = vmatpush1.bf16.msra.mxu0 0
        %616 = vmatprep.subr.bf16.mxu0 0
        %617 = vmatpush1.bf16.msra.mxu0 0
        %618 = vmatprep.subr.bf16.mxu0 0
        %619 = vmatpush1.bf16.msra.mxu0 0
        %620 = vmatprep.subr.bf16.mxu0 0
        %621 = vmatpush1.bf16.msra.mxu0 0
        %622 = vmatprep.subr.bf16.mxu0 0
        %623 = vmatpush1.bf16.msra.mxu0 0
        %624 = vmatprep.mubr.bf16.mxu0 0
        %625 = vmatmul.mubr.bf16.gmra.mrb[0].mxu0 %v575
        %v626 = vpop.f32.mrb[0].mxu0
        %v627 = vadd.f32 0.0, %v626
        %v628 = vpop.f32.mrb[0].mxu0
        %v629 = vadd.f32 0.0, %v628
        %v630 = vpop.f32.mrb[0].mxu0
        %v631 = vadd.f32 0.0, %v630
        %v632 = vpop.f32.mrb[0].mxu0
        %v633 = vadd.f32 0.0, %v632
        %634 = vmatprep.mubr.bf16.mxu0 0
        %635 = vmatmul.mubr.bf16.gmra.mrb[0].mxu0 %v578
        %v636 = vpop.f32.mrb[0].mxu0
        %v637 = vadd.f32 0.0, %v636
        %v638 = vpop.f32.mrb[0].mxu0
        %v639 = vadd.f32 0.0, %v638
        %v640 = vpop.f32.mrb[0].mxu0
        %v641 = vadd.f32 0.0, %v640
        %v642 = vpop.f32.mrb[0].mxu0
        %v643 = vadd.f32 0.0, %v642
        %644 = vmatprep.mubr.bf16.mxu0 0
        %645 = vmatmul.mubr.bf16.gmra.mrb[0].mxu0 %v581
        %v646 = vpop.f32.mrb[0].mxu0
        %v647 = vadd.f32 0.0, %v646
        %v648 = vpop.f32.mrb[0].mxu0
        %v649 = vadd.f32 0.0, %v648
        %v650 = vpop.f32.mrb[0].mxu0
        %v651 = vpop.f32.mrb[0].mxu0
        %652 = vdwg.mxu0
        %653 = vmatprep.subr.bf16.mxu0 0
        %654 = vmatpush1.bf16.msra.mxu0 %v548
        %655 = vmatprep.subr.bf16.mxu0 0
        %656 = vmatpush1.bf16.msra.mxu0 %v551
        %657 = vmatprep.subr.bf16.mxu0 0
        %658 = vmatpush1.bf16.msra.mxu0 %v554
        %659 = vmatprep.subr.bf16.mxu0 0
        %660 = vmatpush1.bf16.msra.mxu0 %v557
        %661 = vmatprep.subr.bf16.mxu0 0
        %662 = vmatpush1.bf16.msra.mxu0 %v590
        %663 = vmatprep.subr.bf16.mxu0 0
        %664 = vmatpush1.bf16.msra.mxu0 0
        %665 = vmatprep.subr.bf16.mxu0 0
        %666 = vmatpush1.bf16.msra.mxu0 0
        %667 = vmatprep.subr.bf16.mxu0 0
        %668 = vmatpush1.bf16.msra.mxu0 0
        %669 = vmatprep.subr.bf16.mxu0 0
        %670 = vmatpush1.bf16.msra.mxu0 0
        %671 = vmatprep.subr.bf16.mxu0 0
        %672 = vmatpush1.bf16.msra.mxu0 0
        %673 = vmatprep.subr.bf16.mxu0 0
        %674 = vmatpush1.bf16.msra.mxu0 0
        %675 = vmatprep.subr.bf16.mxu0 0
        %676 = vmatpush1.bf16.msra.mxu0 0
        %677 = vmatprep.subr.bf16.mxu0 0
        %678 = vmatpush1.bf16.msra.mxu0 0
        %679 = vmatprep.subr.bf16.mxu0 0
        %680 = vmatpush1.bf16.msra.mxu0 0
        %681 = vmatprep.subr.bf16.mxu0 0
        %682 = vmatpush1.bf16.msra.mxu0 0
        %683 = vmatprep.subr.bf16.mxu0 0
        %684 = vmatpush1.bf16.msra.mxu0 0
        %685 = vmatprep.mubr.bf16.mxu0 0
        %686 = vmatmul.mubr.bf16.gmra.mrb[0].mxu0 %v575
        %v687 = vpop.f32.mrb[0].mxu0
        %v688 = vadd.f32 0.0, %v687
        %v689 = vpop.f32.mrb[0].mxu0
        %v690 = vpop.f32.mrb[0].mxu0
        %v691 = vadd.f32 0.0, %v690
        %v692 = vpop.f32.mrb[0].mxu0
        %693 = vmatprep.mubr.bf16.mxu0 0
        %694 = vmatmul.mubr.bf16.gmra.mrb[0].mxu0 %v578
        %v695 = vpop.f32.mrb[0].mxu0
        %v696 = vadd.f32 0.0, %v695
        %v697 = vpop.f32.mrb[0].mxu0
        %v698 = vpop.f32.mrb[0].mxu0
        %v699 = vadd.f32 0.0, %v698
        %v700 = vpop.f32.mrb[0].mxu0
        %701 = vmatprep.mubr.bf16.mxu0 0
        %702 = vmatmul.mubr.bf16.gmra.mrb[0].mxu0 %v581
        %v703 = vpop.f32.mrb[0].mxu0
        %v704 = vadd.f32 0.0, %v703
        %v705 = vpop.f32.mrb[0].mxu0
        %v706 = vpop.f32.mrb[0].mxu0
        %v707 = vpop.f32.mrb[0].mxu0
        %708 = vdwg.mxu0
        %v709 = vmax.f32 %v627, 0.0
        %v710 = vmax.f32 %v629, 0.0
        %v711 = vmax.f32 %v688, 0.0
        %v712 = vmax.f32 %v631, 0.0
        %v713 = vmax.f32 %v633, 0.0
        %v714 = vmax.f32 %v691, 0.0
        %v715 = vmax.f32 %v637, 0.0
        %v716 = vmax.f32 %v639, 0.0
        %v717 = vmax.f32 %v696, 0.0
        %v718 = vmax.f32 %v641, 0.0
        %v719 = vmax.f32 %v643, 0.0
        %v720 = vmax.f32 %v699, 0.0
        %v721 = vmax.f32 %v647, 0.0
        %v722 = vmax.f32 %v649, 0.0
        %v723 = vmax.f32 %v704, 0.0
        %v724 = vpack.c.bf16 %v712, %v709
        %v725 = vpack.c.bf16 %v713, %v710
        %v726 = vpack.c.bf16 %v714, %v711
        %v727 = vpack.c.bf16 %v718, %v715
        %v728 = vpack.c.bf16 %v719, %v716
        %v729 = vpack.c.bf16 %v720, %v717
        %v730 = vpack.c.bf16 %v721, %v721
        %v731 = vpack.c.bf16 %v722, %v722
        %v732 = vpack.c.bf16 %v723, %v723
        %vm733 = vcmask 326656
        %v735 = vsel %vm733, %v242, 0
        %v738 = vsel %vm356, %v730, 0
        %v741 = vsel %vm356, %v731, 0
        %v744 = vsel %vm356, %v732, 0
        %746 = vmatprep.subr.bf16.mxu0 %v725
        %747 = vmatpush1.bf16.msra.mxu0 %v724
        %748 = vmatprep.subr.bf16.mxu0 %v728
        %749 = vmatpush1.bf16.msra.mxu0 %v727
        %750 = vmatprep.subr.bf16.mxu0 %v741
        %751 = vmatpush1.bf16.msra.mxu0 %v738
        %752 = vmatprep.subr.bf16.mxu0 0
        %753 = vmatpush1.bf16.msra.mxu0 0
        %754 = vmatprep.subr.bf16.mxu0 0
        %755 = vmatpush1.bf16.msra.mxu0 0
        %756 = vmatprep.subr.bf16.mxu0 0
        %757 = vmatpush1.bf16.msra.mxu0 0
        %758 = vmatprep.subr.bf16.mxu0 0
        %759 = vmatpush1.bf16.msra.mxu0 0
        %760 = vmatprep.subr.bf16.mxu0 0
        %761 = vmatpush1.bf16.msra.mxu0 0
        %762 = vmatprep.subr.bf16.mxu0 0
        %763 = vmatpush1.bf16.msra.mxu0 0
        %764 = vmatprep.subr.bf16.mxu0 0
        %765 = vmatpush1.bf16.msra.mxu0 0
        %766 = vmatprep.subr.bf16.mxu0 0
        %767 = vmatpush1.bf16.msra.mxu0 0
        %768 = vmatprep.subr.bf16.mxu0 0
        %769 = vmatpush1.bf16.msra.mxu0 0
        %770 = vmatprep.subr.bf16.mxu0 0
        %771 = vmatpush1.bf16.msra.mxu0 0
        %772 = vmatprep.subr.bf16.mxu0 0
        %773 = vmatpush1.bf16.msra.mxu0 0
        %774 = vmatprep.subr.bf16.mxu0 0
        %775 = vmatpush1.bf16.msra.mxu0 0
        %776 = vmatprep.subr.bf16.mxu0 0
        %777 = vmatpush1.bf16.msra.mxu0 0
        %778 = vmatprep.mubr.bf16.mxu0 0
        %779 = vmatmul.mubr.bf16.gmra.mrb[0].mxu0 %v735
        %v780 = vpop.f32.mrb[0].mxu0
        %v781 = vadd.f32 0.0, %v780
        %v782 = vpop.f32.mrb[0].mxu0
        %v783 = vadd.f32 0.0, %v782
        %v784 = vpop.f32.mrb[0].mxu0
        %v785 = vpop.f32.mrb[0].mxu0
        %786 = vdwg.mxu0
        %787 = vmatprep.subr.bf16.mxu0 0
        %788 = vmatpush1.bf16.msra.mxu0 %v726
        %789 = vmatprep.subr.bf16.mxu0 0
        %790 = vmatpush1.bf16.msra.mxu0 %v729
        %791 = vmatprep.subr.bf16.mxu0 0
        %792 = vmatpush1.bf16.msra.mxu0 %v744
        %793 = vmatprep.subr.bf16.mxu0 0
        %794 = vmatpush1.bf16.msra.mxu0 0
        %795 = vmatprep.subr.bf16.mxu0 0
        %796 = vmatpush1.bf16.msra.mxu0 0
        %797 = vmatprep.subr.bf16.mxu0 0
        %798 = vmatpush1.bf16.msra.mxu0 0
        %799 = vmatprep.subr.bf16.mxu0 0
        %800 = vmatpush1.bf16.msra.mxu0 0
        %801 = vmatprep.subr.bf16.mxu0 0
        %802 = vmatpush1.bf16.msra.mxu0 0
        %803 = vmatprep.subr.bf16.mxu0 0
        %804 = vmatpush1.bf16.msra.mxu0 0
        %805 = vmatprep.subr.bf16.mxu0 0
        %806 = vmatpush1.bf16.msra.mxu0 0
        %807 = vmatprep.subr.bf16.mxu0 0
        %808 = vmatpush1.bf16.msra.mxu0 0
        %809 = vmatprep.subr.bf16.mxu0 0
        %810 = vmatpush1.bf16.msra.mxu0 0
        %811 = vmatprep.subr.bf16.mxu0 0
        %812 = vmatpush1.bf16.msra.mxu0 0
        %813 = vmatprep.subr.bf16.mxu0 0
        %814 = vmatpush1.bf16.msra.mxu0 0
        %815 = vmatprep.subr.bf16.mxu0 0
        %816 = vmatpush1.bf16.msra.mxu0 0
        %817 = vmatprep.subr.bf16.mxu0 0
        %818 = vmatpush1.bf16.msra.mxu0 0
        %819 = vmatprep.mubr.bf16.mxu0 0
        %820 = vmatmul.mubr.bf16.gmra.mrb[0].mxu0 %v735
        %v821 = vpop.f32.mrb[0].mxu0
        %v822 = vadd.f32 0.0, %v821
        %v823 = vpop.f32.mrb[0].mxu0
        %v824 = vpop.f32.mrb[0].mxu0
        %v825 = vpop.f32.mrb[0].mxu0
        %826 = vdwg.mxu0
        %v827 = vmax.f32 %v781, 0.0
        %v828 = vmax.f32 %v783, 0.0
        %v829 = vmax.f32 %v822, 0.0
        %v830 = vpack.c.bf16 %v827, %v827
        %v831 = vpack.c.bf16 %v828, %v828
        %v832 = vpack.c.bf16 %v829, %v829
        %vm833 = vcmask 64512
        %v835 = vsel %vm833, %v243, 0
        %v838 = vsel %vm356, %v830, 0
        %v841 = vsel %vm356, %v831, 0
        %v844 = vsel %vm356, %v832, 0
        %846 = vmatprep.subr.bf16.mxu0 %v841
        %847 = vmatpush1.bf16.msra.mxu0 %v838
        %848 = vmatprep.subr.bf16.mxu0 0
        %849 = vmatpush1.bf16.msra.mxu0 0
        %850 = vmatprep.subr.bf16.mxu0 0
        %851 = vmatpush1.bf16.msra.mxu0 0
        %852 = vmatprep.subr.bf16.mxu0 0
        %853 = vmatpush1.bf16.msra.mxu0 0
        %854 = vmatprep.subr.bf16.mxu0 0
        %855 = vmatpush1.bf16.msra.mxu0 0
        %856 = vmatprep.subr.bf16.mxu0 0
        %857 = vmatpush1.bf16.msra.mxu0 0
        %858 = vmatprep.subr.bf16.mxu0 0
        %859 = vmatpush1.bf16.msra.mxu0 0
        %860 = vmatprep.subr.bf16.mxu0 0
        %861 = vmatpush1.bf16.msra.mxu0 0
        %862 = vmatprep.subr.bf16.mxu0 0
        %863 = vmatpush1.bf16.msra.mxu0 0
        %864 = vmatprep.subr.bf16.mxu0 0
        %865 = vmatpush1.bf16.msra.mxu0 0
        %866 = vmatprep.subr.bf16.mxu0 0
        %867 = vmatpush1.bf16.msra.mxu0 0
        %868 = vmatprep.subr.bf16.mxu0 0
        %869 = vmatpush1.bf16.msra.mxu0 0
        %870 = vmatprep.subr.bf16.mxu0 0
        %871 = vmatpush1.bf16.msra.mxu0 0
        %872 = vmatprep.subr.bf16.mxu0 0
        %873 = vmatpush1.bf16.msra.mxu0 0
        %874 = vmatprep.subr.bf16.mxu0 0
        %875 = vmatpush1.bf16.msra.mxu0 0
        %876 = vmatprep.subr.bf16.mxu0 0
        %877 = vmatpush1.bf16.msra.mxu0 0
        %878 = vmatprep.mubr.bf16.mxu0 0
        %879 = vmatmul.mubr.bf16.gmra.mrb[0].mxu0 %v835
        %v880 = vpop.f32.mrb[0].mxu0
        %v881 = vadd.f32 0.0, %v880
        %v882 = vpop.f32.mrb[0].mxu0
        %v883 = vadd.f32 0.0, %v882
        %v884 = vpop.f32.mrb[0].mxu0
        %v885 = vpop.f32.mrb[0].mxu0
        %886 = vdwg.mxu0
        %887 = vmatprep.subr.bf16.mxu0 0
        %888 = vmatpush1.bf16.msra.mxu0 %v844
        %889 = vmatprep.subr.bf16.mxu0 0
        %890 = vmatpush1.bf16.msra.mxu0 0
        %891 = vmatprep.subr.bf16.mxu0 0
        %892 = vmatpush1.bf16.msra.mxu0 0
        %893 = vmatprep.subr.bf16.mxu0 0
        %894 = vmatpush1.bf16.msra.mxu0 0
        %895 = vmatprep.subr.bf16.mxu0 0
        %896 = vmatpush1.bf16.msra.mxu0 0
        %897 = vmatprep.subr.bf16.mxu0 0
        %898 = vmatpush1.bf16.msra.mxu0 0
        %899 = vmatprep.subr.bf16.mxu0 0
        %900 = vmatpush1.bf16.msra.mxu0 0
        %901 = vmatprep.subr.bf16.mxu0 0
        %902 = vmatpush1.bf16.msra.mxu0 0
        %903 = vmatprep.subr.bf16.mxu0 0
        %904 = vmatpush1.bf16.msra.mxu0 0
        %905 = vmatprep.subr.bf16.mxu0 0
        %906 = vmatpush1.bf16.msra.mxu0 0
        %907 = vmatprep.subr.bf16.mxu0 0
        %908 = vmatpush1.bf16.msra.mxu0 0
        %909 = vmatprep.subr.bf16.mxu0 0
        %910 = vmatpush1.bf16.msra.mxu0 0
        %911 = vmatprep.subr.bf16.mxu0 0
        %912 = vmatpush1.bf16.msra.mxu0 0
        %913 = vmatprep.subr.bf16.mxu0 0
        %914 = vmatpush1.bf16.msra.mxu0 0
        %915 = vmatprep.subr.bf16.mxu0 0
        %916 = vmatpush1.bf16.msra.mxu0 0
        %917 = vmatprep.subr.bf16.mxu0 0
        %918 = vmatpush1.bf16.msra.mxu0 0
        %919 = vmatprep.mubr.bf16.mxu0 0
        %920 = vmatmul.mubr.bf16.gmra.mrb[0].mxu0 %v835
        %v921 = vpop.f32.mrb[0].mxu0
        %v922 = vadd.f32 0.0, %v921
        %v923 = vpop.f32.mrb[0].mxu0
        %v924 = vpop.f32.mrb[0].mxu0
        %v925 = vpop.f32.mrb[0].mxu0
        %926 = vdwg.mxu0
        %v927 = vmax.f32 %v881, 0.0
        %v928 = vmax.f32 %v883, 0.0
        %v929 = vmax.f32 %v922, 0.0
        %v930 = vpack.c.bf16 %v927, %v927
        %v931 = vpack.c.bf16 %v928, %v928
        %v932 = vpack.c.bf16 %v929, %v929
        %v934 = vsel %vm833, %v244, 0
        %v937 = vsel %vm356, %v930, 0
        %v940 = vsel %vm356, %v931, 0
        %v943 = vsel %vm356, %v932, 0
        %945 = vmatprep.subr.bf16.mxu0 %v940
        %946 = vmatpush1.bf16.msra.mxu0 %v937
        %947 = vmatprep.subr.bf16.mxu0 0
        %948 = vmatpush1.bf16.msra.mxu0 0
        %949 = vmatprep.subr.bf16.mxu0 0
        %950 = vmatpush1.bf16.msra.mxu0 0
        %951 = vmatprep.subr.bf16.mxu0 0
        %952 = vmatpush1.bf16.msra.mxu0 0
        %953 = vmatprep.subr.bf16.mxu0 0
        %954 = vmatpush1.bf16.msra.mxu0 0
        %955 = vmatprep.subr.bf16.mxu0 0
        %956 = vmatpush1.bf16.msra.mxu0 0
        %957 = vmatprep.subr.bf16.mxu0 0
        %958 = vmatpush1.bf16.msra.mxu0 0
        %959 = vmatprep.subr.bf16.mxu0 0
        %960 = vmatpush1.bf16.msra.mxu0 0
        %961 = vmatprep.subr.bf16.mxu0 0
        %962 = vmatpush1.bf16.msra.mxu0 0
        %963 = vmatprep.subr.bf16.mxu0 0
        %964 = vmatpush1.bf16.msra.mxu0 0
        %965 = vmatprep.subr.bf16.mxu0 0
        %966 = vmatpush1.bf16.msra.mxu0 0
        %967 = vmatprep.subr.bf16.mxu0 0
        %968 = vmatpush1.bf16.msra.mxu0 0
        %969 = vmatprep.subr.bf16.mxu0 0
        %970 = vmatpush1.bf16.msra.mxu0 0
        %971 = vmatprep.subr.bf16.mxu0 0
        %972 = vmatpush1.bf16.msra.mxu0 0
        %973 = vmatprep.subr.bf16.mxu0 0
        %974 = vmatpush1.bf16.msra.mxu0 0
        %975 = vmatprep.subr.bf16.mxu0 0
        %976 = vmatpush1.bf16.msra.mxu0 0
        %977 = vmatprep.mubr.bf16.mxu0 0
        %978 = vmatmul.mubr.bf16.gmra.mrb[0].mxu0 %v934
        %v979 = vpop.f32.mrb[0].mxu0
        %v980 = vadd.f32 0.0, %v979
        %v981 = vpop.f32.mrb[0].mxu0
        %v982 = vadd.f32 0.0, %v981
        %v983 = vpop.f32.mrb[0].mxu0
        %v984 = vpop.f32.mrb[0].mxu0
        %985 = vdwg.mxu0
        %986 = vmatprep.subr.bf16.mxu0 0
        %987 = vmatpush1.bf16.msra.mxu0 %v943
        %988 = vmatprep.subr.bf16.mxu0 0
        %989 = vmatpush1.bf16.msra.mxu0 0
        %990 = vmatprep.subr.bf16.mxu0 0
        %991 = vmatpush1.bf16.msra.mxu0 0
        %992 = vmatprep.subr.bf16.mxu0 0
        %993 = vmatpush1.bf16.msra.mxu0 0
        %994 = vmatprep.subr.bf16.mxu0 0
        %995 = vmatpush1.bf16.msra.mxu0 0
        %996 = vmatprep.subr.bf16.mxu0 0
        %997 = vmatpush1.bf16.msra.mxu0 0
        %998 = vmatprep.subr.bf16.mxu0 0
        %999 = vmatpush1.bf16.msra.mxu0 0
        %1000 = vmatprep.subr.bf16.mxu0 0
        %1001 = vmatpush1.bf16.msra.mxu0 0
        %1002 = vmatprep.subr.bf16.mxu0 0
        %1003 = vmatpush1.bf16.msra.mxu0 0
        %1004 = vmatprep.subr.bf16.mxu0 0
        %1005 = vmatpush1.bf16.msra.mxu0 0
        %1006 = vmatprep.subr.bf16.mxu0 0
        %1007 = vmatpush1.bf16.msra.mxu0 0
        %1008 = vmatprep.subr.bf16.mxu0 0
        %1009 = vmatpush1.bf16.msra.mxu0 0
        %1010 = vmatprep.subr.bf16.mxu0 0
        %1011 = vmatpush1.bf16.msra.mxu0 0
        %1012 = vmatprep.subr.bf16.mxu0 0
        %1013 = vmatpush1.bf16.msra.mxu0 0
        %1014 = vmatprep.subr.bf16.mxu0 0
        %1015 = vmatpush1.bf16.msra.mxu0 0
        %1016 = vmatprep.subr.bf16.mxu0 0
        %1017 = vmatpush1.bf16.msra.mxu0 0
        %1018 = vmatprep.mubr.bf16.mxu0 0
        %1019 = vmatmul.mubr.bf16.gmra.mrb[0].mxu0 %v934
        %v1020 = vpop.f32.mrb[0].mxu0
        %v1021 = vadd.f32 0.0, %v1020
        %v1022 = vpop.f32.mrb[0].mxu0
        %v1023 = vpop.f32.mrb[0].mxu0
        %v1024 = vpop.f32.mrb[0].mxu0
        %1025 = vdwg.mxu0
        %v1026 = vlaneseq
        %v1027 = vshrl.u32 %v1026, 7
        %v1028 = vsub.s32 0, %v1027
        %v1029 = vrot.slane %v980, %v1028
        %v1030 = vlaneseq
        %v1031 = vshrl.u32 %v1030, 7
        %v1032 = vsub.s32 0, %v1031
        %v1033 = vrot.slane %v982, %v1032
        %v1034 = vlaneseq
        %v1035 = vshrl.u32 %v1034, 7
        %v1036 = vsub.s32 0, %v1035
        %v1037 = vrot.slane %v1021, %v1036
        %v1038 = vmul.f32 %v827, %v1029
        %v1039 = vmul.f32 %v828, %v1033
        %v1040 = vmul.f32 %v829, %v1037
        %v1041 = vlaneseq
        %v1042 = vshrl.u32 %v1041, 7
        %v1043 = vsub.s32 1, %v1042
        %v1044 = vrot.slane %v980, %v1043
        %v1045 = vlaneseq
        %v1046 = vshrl.u32 %v1045, 7
        %v1047 = vsub.s32 1, %v1046
        %v1048 = vrot.slane %v982, %v1047
        %v1049 = vlaneseq
        %v1050 = vshrl.u32 %v1049, 7
        %v1051 = vsub.s32 1, %v1050
        %v1052 = vrot.slane %v1021, %v1051
        %v1053 = vmul.f32 %v827, %v1044
        %v1054 = vmul.f32 %v828, %v1048
        %v1055 = vmul.f32 %v829, %v1052
        %v1059 = vrot.slane %v1053, 4
        %v1060 = vrot.slane %v1054, 4
        %v1061 = vrot.slane %v1055, 4
        %v1065 = vadd.f32 %v1038, %v1059
        %v1066 = vadd.f32 %v1039, %v1060
        %v1067 = vadd.f32 %v1040, %v1061
        %v1071 = vrot.slane %v1065, 6
        %v1072 = vrot.slane %v1066, 6
        %v1073 = vrot.slane %v1067, 6
        %vm1077 = vcmask 1041408
        %v1078 = vsel %vm1077, %v980, %v1071
        %v1079 = vsel %vm1077, %v982, %v1072
        %v1080 = vsel %vm1077, %v1021, %v1073
        %vm1081 = vcmask 1045504
        %v1082 = vsel %vm1081, %v1078, 0.0
        %v1083 = vsel %vm1081, %v1079, 0.0
        %v1084 = vsel %vm1081, %v1080, 0.0
        %1085 = vst [vmem:[%s207] sm:$0xff] %v1082
        %1086 = vst [vmem:[%s207 + $0x8] sm:$0xff] %v1083
        %1087 = vst [vmem:[%s207 + $0x10] sm:$0xff] %v1084
        %s1088 = smul.u32 3, %s13
        %p1089 = scmp.lt.s32.totalorder %s1088, 5
        %s1090 = scalar_select %p1089, %s1088, 5
        %s1091 = smul.addr %s1090, 8
        %s1092 = scalar_lea.vmem %s2, %s1091
        // Predicated region
        $region55: #{_forward.1} parent=49 // pred_check
          %p1093 = pneg %p78
        $region56: #{_forward.1} parent=49 // pred_check_branch
          %1095 = sbr.rel (%p1093) target = $region58
        $region57: #{_forward.1} parent=49 // pred_region
          %s1096 = smul.u32 3, %s13
        $region58: #{_forward.1} parent=49 // pred_fallthru
          _
      $region50: #{_forward.1} parent=5 // pred_fallthru
        _
      %p1097 = scmp.le.s32.totalorder 2, %s8
      // Predicated region
      $region59: #{_forward.1} parent=5 // pred_check
        %p1098 = pneg %p1097
      $region60: #{_forward.1} parent=5 // pred_check_branch
        %1100 = sbr.rel (%p1098) target = $region62
      $region61: #{_forward.1} parent=5 // pred_region
        %s1101 = ssub.s32 %s8, 2
        // Predicated region
        $region63: #{_forward.1} parent=61 // pred_check
          %p1102 = pneg %p84
        $region64: #{_forward.1} parent=61 // pred_check_branch
          %1104 = sbr.rel (%p1102) target = $region66
        $region65: #{_forward.1} parent=61 // pred_region
          %s1105 = smul.u32 3, %s14
          %p1106 = scmp.lt.s32.totalorder %s1105, 5
          %s1107 = scalar_select %p1106, %s1105, 5
          %s1108 = smul.addr %s1107, 8
          %s1109 = scalar_lea.vmem %s2, %s1108
        $region66: #{_forward.1} parent=61 // pred_fallthru
          _
      $region62: #{_forward.1} parent=5 // pred_fallthru
        _
    $region6: #{_forward.1} parent=1 // loop_footer
      %s12 = sadd.s32 1, %s8
    $region7: #{_forward.1} parent=1 // loop_footer_branch
      %7 = sbr.rel target = $region3
    $region8: #{_forward.1} parent=1 // loop_exit
      _

</llo_original>
